<compile_context>
chip_gen: v7x
topology: tpu7x:2x2x1
jax: 0.10.0
libtpu: 0.0.40
codegen_flags: <defaults>
</compile_context>

<pallas_src>
import functools

import jax
import jax.numpy as jnp
from jax.experimental import pallas as pl
from jax.experimental.pallas import tpu as pltpu


def _pick_tile_rows(rows, c, itemsize, target_bytes=2 << 20, max_rows=32768):
    """Rows per block: ~2 MiB of logits, multiple of 128, capped at padded rows."""
    tr = target_bytes // max(1, c * itemsize)
    tr = (int(tr) // 128) * 128
    tr = max(128, min(tr, max_rows))
    rows_padded = -(-rows // 128) * 128
    return max(128, min(tr, rows_padded))


def _focal_loss_kernel(x_ref, t_ref, *rest, gamma, use_alpha, rows, tile_rows):
    """One lane-dense row-tile -> (1, 128) partial loss sum.

    x_ref:  (C, TILE_ROWS)   logits (native dtype), rows on the lane axis
    t_ref:  (1, TILE_ROWS)   int32 target class per row
    a_ref:  (C, 1)           float32 per-class alpha (only if use_alpha)
    out_ref:(1, 128)         float32 per-tile lane partial sums
    """
    if use_alpha:
        a_ref, out_ref = rest
    else:
        (out_ref,) = rest

    x = x_ref[...].astype(jnp.float32)            # (C, T)
    t = t_ref[...]                                # (1, T) int32
    c, tr = x.shape

    # log_softmax along the class (sublane) axis, numerically stable.
    m = jnp.max(x, axis=0, keepdims=True)         # (1, T)
    z = x - m
    lse = jnp.log(jnp.sum(jnp.exp(z), axis=0, keepdims=True))
    logp = z - lse                                # (C, T)

    # Gather log-prob at the target class via a one-hot sublane mask.
    class_ids = jax.lax.broadcasted_iota(jnp.int32, (c, tr), 0)
    onehot = class_ids == t                       # (C, T) bool
    logpt = jnp.sum(jnp.where(onehot, logp, 0.0), axis=0, keepdims=True)  # (1, T)

    if use_alpha:
        a = a_ref[...].astype(jnp.float32)        # (C, 1)
        at = jnp.sum(jnp.where(onehot, a, 0.0), axis=0, keepdims=True)    # (1, T)
        logpt_scaled = logpt * at
    else:
        logpt_scaled = logpt

    # Trace-time gamma specialization (gamma is a Python float).
    if gamma == 0.0:
        loss = -logpt_scaled
    else:
        pt = jnp.exp(logpt)                       # pt from the UNscaled logpt
        w = jnp.maximum(1.0 - pt, 0.0)            # guard tiny negative rounding
        if float(gamma).is_integer():
            w = jax.lax.integer_pow(w, int(gamma))
        else:
            w = w ** jnp.float32(gamma)
        loss = -w * logpt_scaled                  # (1, T)

    # Mask rows past the true row count (last-tile remainder padding).
    row_ids = pl.program_id(0) * tile_rows + jax.lax.broadcasted_iota(
        jnp.int32, (1, tr), 1)
    loss = jnp.where(row_ids < rows, loss, 0.0)

    # Lane-aligned tree reduction of (1, T) -> (1, 128) partial sums.
    n_chunks = tr // 128
    chunks = [loss[:, k * 128:(k + 1) * 128] for k in range(n_chunks)]
    while len(chunks) > 1:
        nxt = [a + b for a, b in zip(chunks[::2], chunks[1::2])]
        if len(chunks) % 2:
            nxt.append(chunks[-1])
        chunks = nxt
    out_ref[...] = chunks[0]


def focal_loss(x, target, *, gamma=0.0, alpha=None, size_average=True,
               tile_rows=None):
    """Pallas TPU implementation of FocalLoss.forward.

    x:      (N, C) or (N, C, H, W) logits (any float dtype)
    target: (N,) or (N, H, W) integer class indices
    alpha:  None, a scalar (-> [a, 1-a]), or a per-class weight list/array
    """
    x = jnp.asarray(x)
    if x.ndim > 2:
        n, c = x.shape[0], x.shape[1]
        # PyTorch: view(N,C,-1).transpose(1,2).view(-1,C). We additionally put
        # rows on the lane axis: (C, N*H*W) with column index = n*HW + s.
        xt = jnp.transpose(x.reshape(n, c, -1), (1, 0, 2)).reshape(c, -1)
    else:
        c = x.shape[1]
        xt = x.T                                   # (C, N)
    rows = xt.shape[1]

    t = jnp.asarray(target).reshape(1, -1).astype(jnp.int32)   # (1, ROWS)
    assert t.shape[1] == rows, "target must have one index per logit row"

    # Mirror the PyTorch __init__ alpha handling.
    if isinstance(alpha, (float, int)) and not isinstance(alpha, bool):
        alpha = [float(alpha), 1.0 - float(alpha)]
    use_alpha = alpha is not None

    if tile_rows is None:
        tile_rows = _pick_tile_rows(rows, c, xt.dtype.itemsize)
    assert tile_rows % 128 == 0

    num_tiles = pl.cdiv(rows, tile_rows)

    in_specs = [
        pl.BlockSpec((c, tile_rows), lambda i: (0, i)),   # logits, lane-dense
        pl.BlockSpec((1, tile_rows), lambda i: (0, i)),   # targets
    ]
    args = [xt, t]
    if use_alpha:
        a = jnp.asarray(alpha, dtype=jnp.float32).reshape(c, 1)
        in_specs.append(pl.BlockSpec((c, 1), lambda i: (0, 0)))
        args.append(a)

    kernel = functools.partial(
        _focal_loss_kernel, gamma=float(gamma), use_alpha=use_alpha,
        rows=rows, tile_rows=tile_rows)

    partials = pl.pallas_call(
        kernel,
        out_shape=jax.ShapeDtypeStruct((num_tiles, 128), jnp.float32),
        grid_spec=pltpu.PrefetchScalarGridSpec(
            num_scalar_prefetch=0,
            grid=(num_tiles,),
            in_specs=in_specs,
            out_specs=pl.BlockSpec((1, 128), lambda i: (i, 0)),
        ),
        compiler_params=pltpu.CompilerParams(
            dimension_semantics=("parallel",),     # independent tiles -> megacore OK
        ),
    )(*args)

    total = jnp.sum(partials)
    if size_average:
        return total / jnp.float32(rows)
    return total


def _reference_focal_loss(x, target, gamma, alpha, size_average):
    """Plain-JAX reference mirroring the PyTorch code, for a sanity check."""
    x = jnp.asarray(x, jnp.float32)
    if x.ndim > 2:
        n, c = x.shape[0], x.shape[1]
        x = jnp.transpose(x.reshape(n, c, -1), (0, 2, 1)).reshape(-1, c)
    t = jnp.asarray(target).reshape(-1)
    logp = jax.nn.log_softmax(x, axis=1)
    logpt = jnp.take_along_axis(logp, t[:, None], axis=1)[:, 0]
    pt = jnp.exp(logpt)
    if alpha is not None:
        if isinstance(alpha, (float, int)) and not isinstance(alpha, bool):
            alpha = [float(alpha), 1.0 - float(alpha)]
        at = jnp.asarray(alpha, jnp.float32)[t]
        logpt = logpt * at
    loss = -1.0 * (1.0 - pt) ** gamma * logpt
    return loss.mean() if size_average else loss.sum()


if __name__ == "__main__":
    key = jax.random.PRNGKey(0)
    k1, k2, k3, k4 = jax.random.split(key, 4)

    # Case 1: NCHW logits + spatial targets, gamma=2, per-class alpha, mean.
    B, C, H, W = 2, 4, 16, 16
    x = jax.random.normal(k1, (B, C, H, W), dtype=jnp.float32)
    target = jax.random.randint(k2, (B, H, W), 0, C, dtype=jnp.int32)
    gamma = 2.0
    alpha = [0.25, 0.75, 0.5, 1.0]

    out = focal_loss(x, target, gamma=gamma, alpha=alpha, size_average=True)
    out = jax.block_until_ready(out)
    ref = _reference_focal_loss(x, target, gamma, alpha, True)
    assert jnp.allclose(out, ref, rtol=1e-5, atol=1e-5), (out, ref)

    # Case 2: 2-D logits, rows not a multiple of 128 (remainder masking path),
    # gamma=0 (no focal factor), no alpha, sum reduction.
    N2, C2 = 300, 4
    x2 = jax.random.normal(k3, (N2, C2), dtype=jnp.float32)
    t2 = jax.random.randint(k4, (N2,), 0, C2, dtype=jnp.int32)
    out2 = focal_loss(x2, t2, gamma=0.0, alpha=None, size_average=False)
    out2 = jax.block_until_ready(out2)
    ref2 = _reference_focal_loss(x2, t2, 0.0, None, False)
    assert jnp.allclose(out2, ref2, rtol=1e-5, atol=1e-4), (out2, ref2)

    print("KERNEL_OK")
</pallas_src>

<mosaic_0001>
module attributes {stable_mosaic.version = 11 : i64} {
  func.func @_focal_loss_kernel(%arg0: i32, %arg1: memref<4x512xf32, #tpu.memory_space<vmem>>, %arg2: memref<1x512xi32, #tpu.memory_space<vmem>>, %arg3: memref<4x1xf32, #tpu.memory_space<vmem>>, %arg4: memref<1x128xf32, #tpu.memory_space<vmem>>) attributes {dimension_semantics = [#tpu.dimension_semantics<parallel>], iteration_bounds = array<i64: 1>, scalar_prefetch = 0 : i64, scratch_operands = 0 : i64, tpu.core_type = #tpu.core_type<tc>, window_params = [{transform_indices = @transform_0, window_bounds = array<i64: 4, 512>}, {transform_indices = @transform_1, window_bounds = array<i64: 1, 512>}, {pipeline_mode = #tpu.pipeline_mode<synchronous>, transform_indices = @transform_2, window_bounds = array<i64: 4, 1>}, {transform_indices = @transform_3, window_bounds = array<i64: 1, 128>}]} {
    %c0 = arith.constant 0 : index
    %c0_0 = arith.constant 0 : index
    %0 = vector.load %arg1[%c0, %c0_0] : memref<4x512xf32, #tpu.memory_space<vmem>>, vector<4x512xf32>
    %c0_1 = arith.constant 0 : index
    %c0_2 = arith.constant 0 : index
    %1 = vector.load %arg2[%c0_1, %c0_2] : memref<1x512xi32, #tpu.memory_space<vmem>>, vector<1x512xi32>
    %cst = arith.constant dense<0xFF800000> : vector<512xf32>
    %2 = vector.multi_reduction <maximumf>, %0, %cst [0] : vector<4x512xf32> to vector<512xf32>
    %3 = vector.shape_cast %2 : vector<512xf32> to vector<1x512xf32>
    %4 = vector.broadcast %3 : vector<1x512xf32> to vector<4x512xf32>
    %5 = arith.subf %0, %4 : vector<4x512xf32>
    %6 = math.exp %5 : vector<4x512xf32>
    %cst_3 = arith.constant dense<0.000000e+00> : vector<512xf32>
    %7 = vector.multi_reduction <add>, %6, %cst_3 [0] : vector<4x512xf32> to vector<512xf32>
    %8 = vector.shape_cast %7 : vector<512xf32> to vector<1x512xf32>
    %9 = math.log %8 : vector<1x512xf32>
    %10 = vector.broadcast %9 : vector<1x512xf32> to vector<4x512xf32>
    %11 = arith.subf %5, %10 : vector<4x512xf32>
    %12 = tpu.iota {dimensions = array<i32: 0>} : vector<4x512xi32>
    %13 = vector.broadcast %1 : vector<1x512xi32> to vector<4x512xi32>
    %14 = arith.cmpi eq, %12, %13 : vector<4x512xi32>
    %cst_4 = arith.constant 0.000000e+00 : f32
    %15 = vector.broadcast %cst_4 : f32 to vector<4x512xf32>
    %16 = arith.select %14, %11, %15 : vector<4x512xi1>, vector<4x512xf32>
    %cst_5 = arith.constant dense<0.000000e+00> : vector<512xf32>
    %17 = vector.multi_reduction <add>, %16, %cst_5 [0] : vector<4x512xf32> to vector<512xf32>
    %18 = vector.shape_cast %17 : vector<512xf32> to vector<1x512xf32>
    %c0_6 = arith.constant 0 : index
    %c0_7 = arith.constant 0 : index
    %19 = vector.load %arg3[%c0_6, %c0_7] : memref<4x1xf32, #tpu.memory_space<vmem>>, vector<4x1xf32>
    %cst_8 = arith.constant 0.000000e+00 : f32
    %20 = vector.shape_cast %19 : vector<4x1xf32> to vector<4x1xf32>
    %21 = vector.broadcast %20 : vector<4x1xf32> to vector<4x512xf32>
    %22 = vector.broadcast %cst_8 : f32 to vector<4x512xf32>
    %23 = arith.select %14, %21, %22 : vector<4x512xi1>, vector<4x512xf32>
    %cst_9 = arith.constant dense<0.000000e+00> : vector<512xf32>
    %24 = vector.multi_reduction <add>, %23, %cst_9 [0] : vector<4x512xf32> to vector<512xf32>
    %25 = vector.shape_cast %24 : vector<512xf32> to vector<1x512xf32>
    %26 = arith.mulf %18, %25 : vector<1x512xf32>
    %27 = math.exp %18 : vector<1x512xf32>
    %cst_10 = arith.constant 1.000000e+00 : f32
    %28 = vector.broadcast %cst_10 : f32 to vector<1x512xf32>
    %29 = arith.subf %28, %27 : vector<1x512xf32>
    %cst_11 = arith.constant 0.000000e+00 : f32
    %30 = vector.broadcast %cst_11 : f32 to vector<1x512xf32>
    %31 = arith.maximumf %29, %30 : vector<1x512xf32>
    %32 = arith.mulf %31, %31 : vector<1x512xf32>
    %cst_12 = arith.constant 0.000000e+00 : f32
    %33 = vector.broadcast %cst_12 : f32 to vector<1x512xf32>
    %34 = arith.subf %33, %32 : vector<1x512xf32>
    %35 = arith.mulf %34, %26 : vector<1x512xf32>
    %c512_i32 = arith.constant 512 : i32
    %36 = arith.muli %arg0, %c512_i32 : i32
    %37 = tpu.iota {dimensions = array<i32: 1>} : vector<1x512xi32>
    %38 = vector.broadcast %36 : i32 to vector<1x512xi32>
    %39 = arith.addi %38, %37 : vector<1x512xi32>
    %c512_i32_13 = arith.constant 512 : i32
    %40 = vector.broadcast %c512_i32_13 : i32 to vector<1x512xi32>
    %41 = arith.cmpi slt, %39, %40 : vector<1x512xi32>
    %cst_14 = arith.constant 0.000000e+00 : f32
    %42 = vector.broadcast %cst_14 : f32 to vector<1x512xf32>
    %43 = arith.select %41, %35, %42 : vector<1x512xi1>, vector<1x512xf32>
    %44 = vector.extract_strided_slice %43 {offsets = [0, 0], sizes = [1, 128], strides = [1, 1]} : vector<1x512xf32> to vector<1x128xf32>
    %45 = vector.extract_strided_slice %43 {offsets = [0, 128], sizes = [1, 128], strides = [1, 1]} : vector<1x512xf32> to vector<1x128xf32>
    %46 = vector.extract_strided_slice %43 {offsets = [0, 256], sizes = [1, 128], strides = [1, 1]} : vector<1x512xf32> to vector<1x128xf32>
    %47 = vector.extract_strided_slice %43 {offsets = [0, 384], sizes = [1, 128], strides = [1, 1]} : vector<1x512xf32> to vector<1x128xf32>
    %48 = arith.addf %44, %45 : vector<1x128xf32>
    %49 = arith.addf %46, %47 : vector<1x128xf32>
    %50 = arith.addf %48, %49 : vector<1x128xf32>
    %c0_15 = arith.constant 0 : index
    %c0_16 = arith.constant 0 : index
    %51 = vector.load %arg4[%c0_15, %c0_16] : memref<1x128xf32, #tpu.memory_space<vmem>>, vector<1x128xf32>
    tpu.vector_store %arg4[%c0_15, %c0_16], %50 {strides = array<i32>} : memref<1x128xf32, #tpu.memory_space<vmem>>, vector<1x128xf32>,
    return
  }
  func.func @transform_0(%arg0: i32) -> (i32, i32) {
    %c0_i32 = arith.constant 0 : i32
    %c0_i32_0 = arith.constant 0 : i32
    return %c0_i32, %arg0 : i32, i32
  }
  func.func @transform_1(%arg0: i32) -> (i32, i32) {
    %c0_i32 = arith.constant 0 : i32
    %c0_i32_0 = arith.constant 0 : i32
    return %c0_i32, %arg0 : i32, i32
  }
  func.func @transform_2(%arg0: i32) -> (i32, i32) {
    %c0_i32 = arith.constant 0 : i32
    %c0_i32_0 = arith.constant 0 : i32
    %c0_i32_1 = arith.constant 0 : i32
    return %c0_i32, %c0_i32_0 : i32, i32
  }
  func.func @transform_3(%arg0: i32) -> (i32, i32) {
    %c0_i32 = arith.constant 0 : i32
    %c0_i32_0 = arith.constant 0 : i32
    return %arg0, %c0_i32 : i32, i32
  }
}

</mosaic_0001>

<llo_original>
// kernel: tpu_custom_call.1
$region0: #{tpu_custom_call.1}
  #allocation0 [shape = 'u32[]', space=smem, size = 0x4, offset = 0x4, fixed_abs, tag = 'smem constant byte address 0x4 - core index']
  #allocation1 [shape = 'u32[144,128]{1,0:T(1,128)}', space=vmem, size = 0x12000, scoped, tag = 'internal scratch']
  %s0 = inlined_call_operand.hbm [shape: f32[4,512], index: 0, kind: input, shape index: {}]
  %s1 = inlined_call_operand.vmem [shape: s32[1,512], index: 1, kind: input, shape index: {}]
  %s2 = inlined_call_operand.vmem [shape: f32[4,1], index: 2, kind: input, shape index: {}]
  %s3 = inlined_call_operand.hbm [shape: f32[1,128], index: 3, kind: output, shape index: {}]
  %s4 = sld [smem:[#allocation0]]
  $region26: #{tpu_custom_call.1} parent=0
    _
  %s6 = ssub.s32 1, %s4
  %s7 = scalar_select 0, %s6, %s4
  $region1: #{tpu_custom_call.1} parent=0
    #allocation2 [shape = 'u8[8192]{0}', space=vmem, size = 0x2000, scoped, tag = 'input window, operand 0, single buffered']
    #allocation3 [shape = 's32[1]{0}', space=sflag, size = 0x4, scoped, tag = 'scoped memory for tpu_custom_call.1']
    #allocation4 [shape = 's32[1]{0}', space=sflag, size = 0x4, scoped, tag = 'scoped memory for tpu_custom_call.1']
    #allocation5 [shape = 'u8[512]{0}', space=vmem, size = 0x400, scoped, tag = 'output window, operand 0, single buffered']
    %8 = vsyncpa [#allocation3], 0
    %9 = vsyncpa [#allocation4], 0
    // Predicated region
    $region2: #{tpu_custom_call.1} parent=1 // pred_check
      _
    $region3: #{tpu_custom_call.1} parent=1 // pred_check_branch
      %11 = sbr.rel (0) target = $region5
    $region4: #{tpu_custom_call.1} parent=1 // pred_region
      %s13 = ssub.s32 256, 256
      %14 = vsyncadd [#allocation3], %s13
      %s16 = sshll.u32 [#allocation2], 4
      %s17 = int_to_ptr.vmem [resolvable:$true] %s16
      %19 = dma.hbm_to_vmem [thread:$0]  %s0, 256, %s17, [#allocation3]
    $region5: #{tpu_custom_call.1} parent=1 // pred_fallthru
      _
    // Predicated region
    $region6: #{tpu_custom_call.1} parent=1 // pred_check
      _
    $region7: #{tpu_custom_call.1} parent=1 // pred_check_branch
      %21 = sbr.rel (0) target = $region9
    $region8: #{tpu_custom_call.1} parent=1 // pred_region
      _
    $region9: #{tpu_custom_call.1} parent=1 // pred_fallthru
      _
    // Predicated region
    $region10: #{tpu_custom_call.1} parent=1 // pred_check
      _
    $region11: #{tpu_custom_call.1} parent=1 // pred_check_branch
      %23 = sbr.rel (0) target = $region13
    $region12: #{tpu_custom_call.1} parent=1 // pred_region
      _
    $region13: #{tpu_custom_call.1} parent=1 // pred_fallthru
      _
    // Predicated region
    $region14: #{tpu_custom_call.1} parent=1 // pred_check
      _
    $region15: #{tpu_custom_call.1} parent=1 // pred_check_branch
      %25 = sbr.rel (0) target = $region17
    $region16: #{tpu_custom_call.1} parent=1 // pred_region
      %26 = dma.done [#allocation3], 256
    $region17: #{tpu_custom_call.1} parent=1 // pred_fallthru
      _
    %v27 = vld [vmem:[#allocation2] sm:$0xff]
    %v28 = vld [vmem:[#allocation2 + $0x8] sm:$0xff]
    %v29 = vld [vmem:[%s1] sm:$0xf]
    %v32 = vcombine.high %v27, %v27
    %v33 = vcombine.high %v28, %v28
    %vm36 = vcmask 1043456
    %v37 = vsel %vm36, %v27, -inf
    %v38 = vrot.slane %v37, 4
    %v39 = vmax.f32 %v37, %v38
    %v40 = vrot.slane %v39, 2
    %v41 = vmax.f32 %v39, %v40
    %v42 = vrot.slane %v41, 1
    %v43 = vmax.f32 %v41, %v42
    %v44 = vsel %vm36, %v32, -inf
    %v45 = vrot.slane %v44, 4
    %v46 = vmax.f32 %v44, %v45
    %v47 = vrot.slane %v46, 2
    %v48 = vmax.f32 %v46, %v47
    %v49 = vrot.slane %v48, 1
    %v50 = vmax.f32 %v48, %v49
    %v51 = vsel %vm36, %v28, -inf
    %v52 = vrot.slane %v51, 4
    %v53 = vmax.f32 %v51, %v52
    %v54 = vrot.slane %v53, 2
    %v55 = vmax.f32 %v53, %v54
    %v56 = vrot.slane %v55, 1
    %v57 = vmax.f32 %v55, %v56
    %v58 = vsel %vm36, %v33, -inf
    %v59 = vrot.slane %v58, 4
    %v60 = vmax.f32 %v58, %v59
    %v61 = vrot.slane %v60, 2
    %v62 = vmax.f32 %v60, %v61
    %v63 = vrot.slane %v62, 1
    %v64 = vmax.f32 %v62, %v63
    %v69 = vcombine.low %v43, %v50
    %v70 = vcombine.low %v57, %v64
    %v73 = vsub.f32 %v27, %v69
    %v74 = vsub.f32 %v28, %v70
    %v75 = vmul.f32 %v73, 1.442695
    %v76 = vpow.pop %v75
    %v77 = vmul.f32 %v74, 1.442695
    %v78 = vpow.pop %v77
    %v81 = vcombine.high %v76, %v76
    %v82 = vcombine.high %v78, %v78
    %v85 = vsel %vm36, %v76, 0.0
    %v86 = vrot.slane %v85, 4
    %v87 = vadd.f32 %v85, %v86
    %v88 = vrot.slane %v87, 2
    %v89 = vadd.f32 %v87, %v88
    %v90 = vrot.slane %v89, 1
    %v91 = vadd.f32 %v89, %v90
    %v92 = vsel %vm36, %v81, 0.0
    %v93 = vrot.slane %v92, 4
    %v94 = vadd.f32 %v92, %v93
    %v95 = vrot.slane %v94, 2
    %v96 = vadd.f32 %v94, %v95
    %v97 = vrot.slane %v96, 1
    %v98 = vadd.f32 %v96, %v97
    %v99 = vsel %vm36, %v78, 0.0
    %v100 = vrot.slane %v99, 4
    %v101 = vadd.f32 %v99, %v100
    %v102 = vrot.slane %v101, 2
    %v103 = vadd.f32 %v101, %v102
    %v104 = vrot.slane %v103, 1
    %v105 = vadd.f32 %v103, %v104
    %v106 = vsel %vm36, %v82, 0.0
    %v107 = vrot.slane %v106, 4
    %v108 = vadd.f32 %v106, %v107
    %v109 = vrot.slane %v108, 2
    %v110 = vadd.f32 %v108, %v109
    %v111 = vrot.slane %v110, 1
    %v112 = vadd.f32 %v110, %v111
    %v113 = vlog2.pop %v91
    %v114 = vmul.f32 %v113, 0.6931472
    %v115 = vlog2.pop %v98
    %v116 = vmul.f32 %v115, 0.6931472
    %v117 = vlog2.pop %v105
    %v118 = vmul.f32 %v117, 0.6931472
    %v119 = vlog2.pop %v112
    %v120 = vmul.f32 %v119, 0.6931472
    %v125 = vcombine.low %v114, %v116
    %v126 = vcombine.low %v118, %v120
    %v129 = vsub.f32 %v73, %v125
    %v130 = vsub.f32 %v74, %v126
    %v131 = vlaneseq
    %v132 = vshrl.u32 %v131, 7
    %v133 = vlaneseq
    %v134 = vshrl.u32 %v133, 7
    %v135 = vsub.s32 0, %v134
    %v136 = vrot.slane %v29, %v135
    %v137 = vlaneseq
    %v138 = vshrl.u32 %v137, 7
    %v139 = vsub.s32 1, %v138
    %v140 = vrot.slane %v29, %v139
    %v141 = vlaneseq
    %v142 = vshrl.u32 %v141, 7
    %v143 = vsub.s32 2, %v142
    %v144 = vrot.slane %v29, %v143
    %v145 = vlaneseq
    %v146 = vshrl.u32 %v145, 7
    %v147 = vsub.s32 3, %v146
    %v148 = vrot.slane %v29, %v147
    %vm149 = vcmp.eq.s32.totalorder %v132, %v136
    %vm150 = vcmp.eq.s32.totalorder %v132, %v140
    %vm151 = vcmp.eq.s32.totalorder %v132, %v144
    %vm152 = vcmp.eq.s32.totalorder %v132, %v148
    %v155 = vcombine.high %v129, %v129
    %v156 = vcombine.high %v130, %v130
    %v159 = vsel %vm149, %v129, 0.0
    %v160 = vsel %vm150, %v155, 0.0
    %v161 = vsel %vm151, %v130, 0.0
    %v162 = vsel %vm152, %v156, 0.0
    %v163 = vsel %vm36, %v159, 0.0
    %v164 = vrot.slane %v163, 4
    %v165 = vadd.f32 %v163, %v164
    %v166 = vrot.slane %v165, 2
    %v167 = vadd.f32 %v165, %v166
    %v168 = vrot.slane %v167, 1
    %v169 = vadd.f32 %v167, %v168
    %v170 = vsel %vm36, %v160, 0.0
    %v171 = vrot.slane %v170, 4
    %v172 = vadd.f32 %v170, %v171
    %v173 = vrot.slane %v172, 2
    %v174 = vadd.f32 %v172, %v173
    %v175 = vrot.slane %v174, 1
    %v176 = vadd.f32 %v174, %v175
    %v177 = vsel %vm36, %v161, 0.0
    %v178 = vrot.slane %v177, 4
    %v179 = vadd.f32 %v177, %v178
    %v180 = vrot.slane %v179, 2
    %v181 = vadd.f32 %v179, %v180
    %v182 = vrot.slane %v181, 1
    %v183 = vadd.f32 %v181, %v182
    %v184 = vsel %vm36, %v162, 0.0
    %v185 = vrot.slane %v184, 4
    %v186 = vadd.f32 %v184, %v185
    %v187 = vrot.slane %v186, 2
    %v188 = vadd.f32 %v186, %v187
    %v189 = vrot.slane %v188, 1
    %v190 = vadd.f32 %v188, %v189
    %v191 = vld [vmem:[%s2] sm:$0xf]
    %193 = vset.pattern.permute.xlu0 0
    %194 = vperm.xlu0 %193, %v191
    %v195 = vpop.permute.xlu0 %194
    %v197 = vsel %vm149, %v195, 0.0
    %v198 = vsel %vm150, %v195, 0.0
    %v199 = vsel %vm151, %v195, 0.0
    %v200 = vsel %vm152, %v195, 0.0
    %v201 = vsel %vm36, %v197, 0.0
    %v202 = vrot.slane %v201, 4
    %v203 = vadd.f32 %v201, %v202
    %v204 = vrot.slane %v203, 2
    %v205 = vadd.f32 %v203, %v204
    %v206 = vrot.slane %v205, 1
    %v207 = vadd.f32 %v205, %v206
    %v208 = vsel %vm36, %v198, 0.0
    %v209 = vrot.slane %v208, 4
    %v210 = vadd.f32 %v208, %v209
    %v211 = vrot.slane %v210, 2
    %v212 = vadd.f32 %v210, %v211
    %v213 = vrot.slane %v212, 1
    %v214 = vadd.f32 %v212, %v213
    %v215 = vsel %vm36, %v199, 0.0
    %v216 = vrot.slane %v215, 4
    %v217 = vadd.f32 %v215, %v216
    %v218 = vrot.slane %v217, 2
    %v219 = vadd.f32 %v217, %v218
    %v220 = vrot.slane %v219, 1
    %v221 = vadd.f32 %v219, %v220
    %v222 = vsel %vm36, %v200, 0.0
    %v223 = vrot.slane %v222, 4
    %v224 = vadd.f32 %v222, %v223
    %v225 = vrot.slane %v224, 2
    %v226 = vadd.f32 %v224, %v225
    %v227 = vrot.slane %v226, 1
    %v228 = vadd.f32 %v226, %v227
    %v229 = vmul.f32 %v169, %v207
    %v230 = vmul.f32 %v176, %v214
    %v231 = vmul.f32 %v183, %v221
    %v232 = vmul.f32 %v190, %v228
    %v233 = vmul.f32 %v169, 1.442695
    %v234 = vpow.pop %v233
    %v235 = vmul.f32 %v176, 1.442695
    %v236 = vpow.pop %v235
    %v237 = vmul.f32 %v183, 1.442695
    %v238 = vpow.pop %v237
    %v239 = vmul.f32 %v190, 1.442695
    %v240 = vpow.pop %v239
    %v241 = vsub.f32 1.0, %v234
    %v242 = vsub.f32 1.0, %v236
    %v243 = vsub.f32 1.0, %v238
    %v244 = vsub.f32 1.0, %v240
    %v245 = vmax.f32 %v241, 0.0
    %v246 = vmax.f32 %v242, 0.0
    %v247 = vmax.f32 %v243, 0.0
    %v248 = vmax.f32 %v244, 0.0
    %v249 = vmul.f32 %v245, %v245
    %v250 = vmul.f32 %v246, %v246
    %v251 = vmul.f32 %v247, %v247
    %v252 = vmul.f32 %v248, %v248
    %v253 = vsub.f32 0.0, %v249
    %v254 = vsub.f32 0.0, %v250
    %v255 = vsub.f32 0.0, %v251
    %v256 = vsub.f32 0.0, %v252
    %v257 = vmul.f32 %v253, %v229
    %v258 = vmul.f32 %v254, %v230
    %v259 = vmul.f32 %v255, %v231
    %v260 = vmul.f32 %v256, %v232
    %s261 = smul.u32 0, 512
    %v262 = vlaneseq
    %v263 = vand.u32 %v262, 127
    %v264 = vadd.s32 %v263, 128
    %v265 = vadd.s32 %v263, 256
    %v266 = vadd.s32 %v263, 384
    %v267 = vstv %s261
    %v268 = vadd.s32 %v267, %v263
    %v269 = vadd.s32 %v267, %v264
    %v270 = vadd.s32 %v267, %v265
    %v271 = vadd.s32 %v267, %v266
    %vm272 = vcmp.lt.s32.totalorder %v268, 512
    %vm273 = vcmp.lt.s32.totalorder %v269, 512
    %vm274 = vcmp.lt.s32.totalorder %v270, 512
    %vm275 = vcmp.lt.s32.totalorder %v271, 512
    %v276 = vsel %vm272, %v257, 0.0
    %v277 = vsel %vm273, %v258, 0.0
    %v278 = vsel %vm274, %v259, 0.0
    %v279 = vsel %vm275, %v260, 0.0
    %v280 = vadd.f32 %v276, %v277
    %v281 = vadd.f32 %v278, %v279
    %v282 = vadd.f32 %v280, %v281
    %283 = vst [vmem:[#allocation5] sm:$0x1] %v282
    // Predicated region
    $region18: #{tpu_custom_call.1} parent=1 // pred_check
      _
    $region19: #{tpu_custom_call.1} parent=1 // pred_check_branch
      %285 = sbr.rel (0) target = $region21
    $region20: #{tpu_custom_call.1} parent=1 // pred_region
      %s287 = ssub.s32 16, 16
      %288 = vsyncadd [#allocation4], %s287
      %s290 = sshll.u32 [#allocation5], 4
      %s291 = int_to_ptr.vmem [resolvable:$true] %s290
      %293 = dma.vmem_to_hbm [thread:$0]  %s291, 16, %s3, [#allocation4]
    $region21: #{tpu_custom_call.1} parent=1 // pred_fallthru
      _
    // Predicated region
    $region22: #{tpu_custom_call.1} parent=1 // pred_check
      _
    $region23: #{tpu_custom_call.1} parent=1 // pred_check_branch
      %295 = sbr.rel (0) target = $region25
    $region24: #{tpu_custom_call.1} parent=1 // pred_region
      %296 = dma.done [#allocation4], 16
    $region25: #{tpu_custom_call.1} parent=1 // pred_fallthru
      _
    %297 = vsyncpa [#allocation3], 1
    %298 = vsyncpa [#allocation4], 1

</llo_original>
